<compile_context>
chip_gen: v7x
topology: tpu7x:2x2x1
jax: 0.10.0
libtpu: 0.0.40
codegen_flags: <defaults>
</compile_context>

<pallas_src>
import jax
import jax.numpy as jnp
from jax.experimental import pallas as pl
from jax.experimental.pallas import tpu as pltpu

NZ = 2
IMAGE_SIZE = 28
H1 = NZ * 4            # 8
H2 = NZ * 16           # 32
OUT = IMAGE_SIZE ** 2  # 784
BN_EPS = 1e-5
LEAKY_SLOPE = 0.2

# v7x scoped-VMEM guard for the ungridded stage-1 call (~2 KiB/row resident).
MAX_STAGE1_BATCH = 8192
# Stage-2 rows per grid step (review: sweep 512-1024; ~3 MiB output tile at 1024).
MAX_BATCH_TILE = 1024


def _round_up(n, m):
    return ((n + m - 1) // m) * m


def _cdiv(a, b):
    return -(-a // b)


def _leaky_relu(x):
    return jnp.where(x >= 0, x, LEAKY_SLOPE * x)


def _batchnorm_train(x, gamma, beta):
    # PyTorch BatchNorm1d (training=True): normalize with biased batch stats.
    mean = jnp.mean(x, axis=0, keepdims=True)
    var = jnp.mean((x - mean) * (x - mean), axis=0, keepdims=True)
    return (x - mean) * jax.lax.rsqrt(var + BN_EPS) * gamma + beta


# ---------------------------------------------------------------------------
# Stage 1: layers 1-3 (needs full-batch BatchNorm stats) — single ungridded call.
# ---------------------------------------------------------------------------
def hidden_kernel(x_ref,
                  w1_ref, b1_ref,
                  w2_ref, b2_ref, g2_ref, be2_ref,
                  w3_ref, b3_ref, g3_ref, be3_ref,
                  h_ref):
    x = x_ref[...].astype(jnp.float32)

    # Layer 1: Linear(2, 8) + LeakyReLU
    h = jnp.dot(x, w1_ref[...], preferred_element_type=jnp.float32) + b1_ref[...]
    h = _leaky_relu(h)

    # Layer 2: Linear(8, 32) + BatchNorm1d(32) + LeakyReLU
    h = jnp.dot(h, w2_ref[...], preferred_element_type=jnp.float32) + b2_ref[...]
    h = _batchnorm_train(h, g2_ref[...], be2_ref[...])
    h = _leaky_relu(h)

    # Layer 3: Linear(32, 32) + BatchNorm1d(32) + LeakyReLU
    h = jnp.dot(h, w3_ref[...], preferred_element_type=jnp.float32) + b3_ref[...]
    h = _batchnorm_train(h, g3_ref[...], be3_ref[...])
    h = _leaky_relu(h)

    h_ref[...] = h


# ---------------------------------------------------------------------------
# Stage 2: Linear(32, 784) + Tanh — gridded over the batch (writeback-bound).
# ---------------------------------------------------------------------------
def out_layer_kernel(h_ref, w4_ref, b4_ref, o_ref):
    y = jnp.dot(h_ref[...], w4_ref[...], preferred_element_type=jnp.float32)
    # TODO(synk): confirm in the v7x bundle dump that tanh lowers to a single EUP
    # push per element (not an exp/div decomposition), especially on the bf16 path.
    o_ref[...] = jnp.tanh(y + b4_ref[...]).astype(o_ref.dtype)


def _choose_batch_tiling(batch, row_align, max_tile=MAX_BATCH_TILE):
    """Pick (padded_batch, tile_rows, n_tiles) for the stage-2 grid.

    Goals (per perf review):
      * tile_rows is a multiple of `row_align` (8 for f32 blocks, 16 for bf16);
      * tile_rows * n_tiles == padded_batch exactly (no partial blocks);
      * pad waste bounded by ~row_align rows per tile (never round_up(B, TB));
      * n_tiles >= 2 (and even when large) so v7x's two TensorCores stay busy.
    """
    bp_min = _round_up(batch, row_align)
    if bp_min <= max_tile:
        n_tiles = 2 if bp_min >= 2 * row_align else 1
    else:
        n_tiles = _cdiv(bp_min, max_tile)
        if n_tiles % 2:
            n_tiles += 1  # balance the two v7x TensorCores
    tile_rows = _round_up(_cdiv(bp_min, n_tiles), row_align)
    return tile_rows * n_tiles, tile_rows, n_tiles


def generator_forward(x, params, *, bf16_stage2=False):
    """Forward pass.  x: any shape with total size divisible by NZ (.view(-1, nz)).

    bf16_stage2: run the writeback-bound output layer with bf16 operands and a
    bf16 output (f32 MXU accumulation) — halves the dominant HBM byte stream.
    Off by default to preserve the PyTorch module's f32 numerics.
    """
    assert x.size % NZ == 0, f"input total size {x.size} not divisible by nz={NZ}"
    x2d = x.reshape(-1, NZ).astype(jnp.float32)
    B = x2d.shape[0]

    # v7x VMEM cliff guard for the ungridded stage-1 call.
    # TODO(synk): batch-tiled two-pass BatchNorm (sum/sum-sq accumulation over an
    # "arbitrary" grid axis) to lift this ceiling for very large batches.
    assert B <= MAX_STAGE1_BATCH, (
        f"batch {B} exceeds stage-1 VMEM guard ({MAX_STAGE1_BATCH})")

    vmem_spec = pl.BlockSpec(memory_space=pltpu.MemorySpace.VMEM)

    # ---- Stage 1: full-batch hidden computation (layers 1-3) -> (B, 32) f32 ----
    stage1_args = (
        x2d,
        params["w1"], params["b1"],
        params["w2"], params["b2"], params["g2"], params["be2"],
        params["w3"], params["b3"], params["g3"], params["be3"],
    )
    h3 = pl.pallas_call(
        hidden_kernel,
        out_shape=jax.ShapeDtypeStruct((B, H2), jnp.float32),
        in_specs=[vmem_spec] * len(stage1_args),
        out_specs=vmem_spec,
    )(*stage1_args)

    # ---- Stage 2: batch-tiled output layer --------------------------------
    if bf16_stage2:
        op_dtype, row_align = jnp.bfloat16, 16   # bf16 min sublane tile is 16
    else:
        op_dtype, row_align = jnp.float32, 8

    Bp, TB, n_tiles = _choose_batch_tiling(B, row_align)

    h3c = h3.astype(op_dtype)
    if Bp != B:
        h3c = jnp.pad(h3c, ((0, Bp - B), (0, 0)))   # tiny (B,32) array — cheap
    w4 = params["w4"].astype(op_dtype)               # no-op when already op_dtype
    b4 = params["b4"]                                 # bias added in f32

    itemsize = jnp.dtype(op_dtype).itemsize
    cost = pl.CostEstimate(
        flops=2 * Bp * H2 * OUT,
        transcendentals=Bp * OUT,
        bytes_accessed=(Bp * OUT + Bp * H2 + H2 * OUT) * itemsize + OUT * 4,
    )

    out = pl.pallas_call(
        out_layer_kernel,
        out_shape=jax.ShapeDtypeStruct((Bp, OUT), op_dtype),
        grid=(n_tiles,),
        in_specs=[
            pl.BlockSpec((TB, H2), lambda i: (i, 0)),
            pl.BlockSpec((H2, OUT), lambda i: (0, 0)),   # resident weights
            pl.BlockSpec((1, OUT), lambda i: (0, 0)),    # resident bias
        ],
        out_specs=pl.BlockSpec((TB, OUT), lambda i: (i, 0)),
        compiler_params=pltpu.CompilerParams(
            dimension_semantics=("parallel",),
        ),
        cost_estimate=cost,
    )(h3c, w4, b4)

    if Bp != B:
        # Only when B wasn't already row-aligned; pad waste is <= row_align-1 rows
        # per tile, so the writeback stays proportional to real work.
        out = out[:B]
    return out.reshape(-1, 1, IMAGE_SIZE, IMAGE_SIZE)


def init_params(key):
    """Deterministic synthetic parameter init (shapes match the PyTorch module)."""
    ks = jax.random.split(key, 8)

    def lin(k, fan_in, fan_out):
        kw, kb = jax.random.split(k)
        bound = 1.0 / jnp.sqrt(fan_in)
        # stored as [in, out] so kernels do x @ W
        w = jax.random.uniform(kw, (fan_in, fan_out), jnp.float32, -bound, bound)
        b = jax.random.uniform(kb, (1, fan_out), jnp.float32, -bound, bound)
        return w, b

    w1, b1 = lin(ks[0], NZ, H1)
    w2, b2 = lin(ks[1], H1, H2)
    w3, b3 = lin(ks[2], H2, H2)
    w4, b4 = lin(ks[3], H2, OUT)

    # BatchNorm affine params (PyTorch default init: gamma=1, beta=0)
    g2 = jnp.ones((1, H2), jnp.float32)
    be2 = jnp.zeros((1, H2), jnp.float32)
    g3 = jnp.ones((1, H2), jnp.float32)
    be3 = jnp.zeros((1, H2), jnp.float32)

    return {
        "w1": w1, "b1": b1,
        "w2": w2, "b2": b2, "g2": g2, "be2": be2,
        "w3": w3, "b3": b3, "g3": g3, "be3": be3,
        "w4": w4, "b4": b4,
    }


def reference_forward(x, params):
    """Pure-JAX reference for correctness check (HIGHEST precision matmuls)."""
    def mm(a, b):
        return jnp.dot(a, b, precision=jax.lax.Precision.HIGHEST,
                       preferred_element_type=jnp.float32)

    h = x.reshape(-1, NZ).astype(jnp.float32)
    h = _leaky_relu(mm(h, params["w1"]) + params["b1"])
    h = mm(h, params["w2"]) + params["b2"]
    h = _leaky_relu(_batchnorm_train(h, params["g2"], params["be2"]))
    h = mm(h, params["w3"]) + params["b3"]
    h = _leaky_relu(_batchnorm_train(h, params["g3"], params["be3"]))
    y = jnp.tanh(mm(h, params["w4"]) + params["b4"])
    return y.reshape(-1, 1, IMAGE_SIZE, IMAGE_SIZE)


if __name__ == "__main__":
    key = jax.random.PRNGKey(0)
    k_param, k_x = jax.random.split(key)

    params = init_params(k_param)

    # Latent input: batch=8, nz=2 (mirrors typical GAN noise input)
    x = jax.random.normal(k_x, (8, NZ), jnp.float32)

    # f32 path (matches PyTorch module numerics)
    out = jax.block_until_ready(generator_forward(x, params))
    ref = reference_forward(x, params)
    assert out.shape == (8, 1, IMAGE_SIZE, IMAGE_SIZE), out.shape
    assert jnp.allclose(out, ref, atol=1e-5, rtol=1e-5), "f32 path mismatch vs reference"

    # Optional writeback-halving path: bf16 operands/output, f32 accumulation.
    out_bf16 = jax.block_until_ready(generator_forward(x, params, bf16_stage2=True))
    assert out_bf16.shape == (8, 1, IMAGE_SIZE, IMAGE_SIZE), out_bf16.shape
    assert jnp.allclose(out_bf16.astype(jnp.float32), ref, atol=5e-2), \
        "bf16 path too far off"

    print("KERNEL_OK")
</pallas_src>

<mosaic_0001>
module attributes {stable_mosaic.version = 11 : i64} {
  func.func @hidden_kernel(%arg0: memref<8x2xf32, #tpu.memory_space<vmem>>, %arg1: memref<2x8xf32, #tpu.memory_space<vmem>>, %arg2: memref<1x8xf32, #tpu.memory_space<vmem>>, %arg3: memref<8x32xf32, #tpu.memory_space<vmem>>, %arg4: memref<1x32xf32, #tpu.memory_space<vmem>>, %arg5: memref<1x32xf32, #tpu.memory_space<vmem>>, %arg6: memref<1x32xf32, #tpu.memory_space<vmem>>, %arg7: memref<32x32xf32, #tpu.memory_space<vmem>>, %arg8: memref<1x32xf32, #tpu.memory_space<vmem>>, %arg9: memref<1x32xf32, #tpu.memory_space<vmem>>, %arg10: memref<1x32xf32, #tpu.memory_space<vmem>>, %arg11: memref<8x32xf32, #tpu.memory_space<vmem>>) attributes {dimension_semantics = [], scalar_prefetch = 0 : i64, scratch_operands = 0 : i64, tpu.core_type = #tpu.core_type<tc>} {
    %c0 = arith.constant 0 : index
    %c0_0 = arith.constant 0 : index
    %0 = vector.load %arg0[%c0, %c0_0] : memref<8x2xf32, #tpu.memory_space<vmem>>, vector<8x2xf32>
    %c0_1 = arith.constant 0 : index
    %c0_2 = arith.constant 0 : index
    %1 = vector.load %arg1[%c0_1, %c0_2] : memref<2x8xf32, #tpu.memory_space<vmem>>, vector<2x8xf32>
    %cst = arith.constant dense<0.000000e+00> : vector<8x8xf32>
    %2 = tpu.matmul %0, %1, %cst {dimension_numbers = #tpu.dot_dimension_numbers<[1], [0], [0], [1], [0, 0, 1, 1], [], []>} : vector<8x2xf32>, vector<2x8xf32>, vector<8x8xf32> -> vector<8x8xf32>
    %c0_3 = arith.constant 0 : index
    %c0_4 = arith.constant 0 : index
    %3 = vector.load %arg2[%c0_3, %c0_4] : memref<1x8xf32, #tpu.memory_space<vmem>>, vector<1x8xf32>
    %4 = vector.broadcast %3 : vector<1x8xf32> to vector<8x8xf32>
    %5 = arith.addf %2, %4 : vector<8x8xf32>
    %cst_5 = arith.constant 0.000000e+00 : f32
    %6 = vector.broadcast %cst_5 : f32 to vector<8x8xf32>
    %7 = arith.cmpf oge, %5, %6 : vector<8x8xf32>
    %cst_6 = arith.constant 2.000000e-01 : f32
    %8 = vector.broadcast %cst_6 : f32 to vector<8x8xf32>
    %9 = arith.mulf %8, %5 : vector<8x8xf32>
    %10 = arith.select %7, %5, %9 : vector<8x8xi1>, vector<8x8xf32>
    %c0_7 = arith.constant 0 : index
    %c0_8 = arith.constant 0 : index
    %11 = vector.load %arg3[%c0_7, %c0_8] : memref<8x32xf32, #tpu.memory_space<vmem>>, vector<8x32xf32>
    %cst_9 = arith.constant dense<0.000000e+00> : vector<8x32xf32>
    %12 = tpu.matmul %10, %11, %cst_9 {dimension_numbers = #tpu.dot_dimension_numbers<[1], [0], [0], [1], [0, 0, 1, 1], [], []>} : vector<8x8xf32>, vector<8x32xf32>, vector<8x32xf32> -> vector<8x32xf32>
    %c0_10 = arith.constant 0 : index
    %c0_11 = arith.constant 0 : index
    %13 = vector.load %arg4[%c0_10, %c0_11] : memref<1x32xf32, #tpu.memory_space<vmem>>, vector<1x32xf32>
    %14 = vector.broadcast %13 : vector<1x32xf32> to vector<8x32xf32>
    %15 = arith.addf %12, %14 : vector<8x32xf32>
    %c0_12 = arith.constant 0 : index
    %c0_13 = arith.constant 0 : index
    %16 = vector.load %arg5[%c0_12, %c0_13] : memref<1x32xf32, #tpu.memory_space<vmem>>, vector<1x32xf32>
    %c0_14 = arith.constant 0 : index
    %c0_15 = arith.constant 0 : index
    %17 = vector.load %arg6[%c0_14, %c0_15] : memref<1x32xf32, #tpu.memory_space<vmem>>, vector<1x32xf32>
    %cst_16 = arith.constant dense<0.000000e+00> : vector<32xf32>
    %18 = vector.multi_reduction <add>, %15, %cst_16 [0] : vector<8x32xf32> to vector<32xf32>
    %19 = vector.shape_cast %18 : vector<32xf32> to vector<1x32xf32>
    %cst_17 = arith.constant 8.000000e+00 : f32
    %20 = vector.broadcast %cst_17 : f32 to vector<1x32xf32>
    %21 = arith.divf %19, %20 : vector<1x32xf32>
    %22 = vector.broadcast %21 : vector<1x32xf32> to vector<8x32xf32>
    %23 = arith.subf %15, %22 : vector<8x32xf32>
    %24 = vector.broadcast %21 : vector<1x32xf32> to vector<8x32xf32>
    %25 = arith.subf %15, %24 : vector<8x32xf32>
    %26 = arith.mulf %23, %25 : vector<8x32xf32>
    %cst_18 = arith.constant dense<0.000000e+00> : vector<32xf32>
    %27 = vector.multi_reduction <add>, %26, %cst_18 [0] : vector<8x32xf32> to vector<32xf32>
    %28 = vector.shape_cast %27 : vector<32xf32> to vector<1x32xf32>
    %cst_19 = arith.constant 8.000000e+00 : f32
    %29 = vector.broadcast %cst_19 : f32 to vector<1x32xf32>
    %30 = arith.divf %28, %29 : vector<1x32xf32>
    %31 = vector.broadcast %21 : vector<1x32xf32> to vector<8x32xf32>
    %32 = arith.subf %15, %31 : vector<8x32xf32>
    %cst_20 = arith.constant 9.99999974E-6 : f32
    %33 = vector.broadcast %cst_20 : f32 to vector<1x32xf32>
    %34 = arith.addf %30, %33 : vector<1x32xf32>
    %35 = math.rsqrt %34 : vector<1x32xf32>
    %36 = vector.broadcast %35 : vector<1x32xf32> to vector<8x32xf32>
    %37 = arith.mulf %32, %36 : vector<8x32xf32>
    %38 = vector.broadcast %16 : vector<1x32xf32> to vector<8x32xf32>
    %39 = arith.mulf %37, %38 : vector<8x32xf32>
    %40 = vector.broadcast %17 : vector<1x32xf32> to vector<8x32xf32>
    %41 = arith.addf %39, %40 : vector<8x32xf32>
    %cst_21 = arith.constant 0.000000e+00 : f32
    %42 = vector.broadcast %cst_21 : f32 to vector<8x32xf32>
    %43 = arith.cmpf oge, %41, %42 : vector<8x32xf32>
    %cst_22 = arith.constant 2.000000e-01 : f32
    %44 = vector.broadcast %cst_22 : f32 to vector<8x32xf32>
    %45 = arith.mulf %44, %41 : vector<8x32xf32>
    %46 = arith.select %43, %41, %45 : vector<8x32xi1>, vector<8x32xf32>
    %c0_23 = arith.constant 0 : index
    %c0_24 = arith.constant 0 : index
    %47 = vector.load %arg7[%c0_23, %c0_24] : memref<32x32xf32, #tpu.memory_space<vmem>>, vector<32x32xf32>
    %cst_25 = arith.constant dense<0.000000e+00> : vector<8x32xf32>
    %48 = tpu.matmul %46, %47, %cst_25 {dimension_numbers = #tpu.dot_dimension_numbers<[1], [0], [0], [1], [0, 0, 1, 1], [], []>} : vector<8x32xf32>, vector<32x32xf32>, vector<8x32xf32> -> vector<8x32xf32>
    %c0_26 = arith.constant 0 : index
    %c0_27 = arith.constant 0 : index
    %49 = vector.load %arg8[%c0_26, %c0_27] : memref<1x32xf32, #tpu.memory_space<vmem>>, vector<1x32xf32>
    %50 = vector.broadcast %49 : vector<1x32xf32> to vector<8x32xf32>
    %51 = arith.addf %48, %50 : vector<8x32xf32>
    %c0_28 = arith.constant 0 : index
    %c0_29 = arith.constant 0 : index
    %52 = vector.load %arg9[%c0_28, %c0_29] : memref<1x32xf32, #tpu.memory_space<vmem>>, vector<1x32xf32>
    %c0_30 = arith.constant 0 : index
    %c0_31 = arith.constant 0 : index
    %53 = vector.load %arg10[%c0_30, %c0_31] : memref<1x32xf32, #tpu.memory_space<vmem>>, vector<1x32xf32>
    %cst_32 = arith.constant dense<0.000000e+00> : vector<32xf32>
    %54 = vector.multi_reduction <add>, %51, %cst_32 [0] : vector<8x32xf32> to vector<32xf32>
    %55 = vector.shape_cast %54 : vector<32xf32> to vector<1x32xf32>
    %cst_33 = arith.constant 8.000000e+00 : f32
    %56 = vector.broadcast %cst_33 : f32 to vector<1x32xf32>
    %57 = arith.divf %55, %56 : vector<1x32xf32>
    %58 = vector.broadcast %57 : vector<1x32xf32> to vector<8x32xf32>
    %59 = arith.subf %51, %58 : vector<8x32xf32>
    %60 = vector.broadcast %57 : vector<1x32xf32> to vector<8x32xf32>
    %61 = arith.subf %51, %60 : vector<8x32xf32>
    %62 = arith.mulf %59, %61 : vector<8x32xf32>
    %cst_34 = arith.constant dense<0.000000e+00> : vector<32xf32>
    %63 = vector.multi_reduction <add>, %62, %cst_34 [0] : vector<8x32xf32> to vector<32xf32>
    %64 = vector.shape_cast %63 : vector<32xf32> to vector<1x32xf32>
    %cst_35 = arith.constant 8.000000e+00 : f32
    %65 = vector.broadcast %cst_35 : f32 to vector<1x32xf32>
    %66 = arith.divf %64, %65 : vector<1x32xf32>
    %67 = vector.broadcast %57 : vector<1x32xf32> to vector<8x32xf32>
    %68 = arith.subf %51, %67 : vector<8x32xf32>
    %cst_36 = arith.constant 9.99999974E-6 : f32
    %69 = vector.broadcast %cst_36 : f32 to vector<1x32xf32>
    %70 = arith.addf %66, %69 : vector<1x32xf32>
    %71 = math.rsqrt %70 : vector<1x32xf32>
    %72 = vector.broadcast %71 : vector<1x32xf32> to vector<8x32xf32>
    %73 = arith.mulf %68, %72 : vector<8x32xf32>
    %74 = vector.broadcast %52 : vector<1x32xf32> to vector<8x32xf32>
    %75 = arith.mulf %73, %74 : vector<8x32xf32>
    %76 = vector.broadcast %53 : vector<1x32xf32> to vector<8x32xf32>
    %77 = arith.addf %75, %76 : vector<8x32xf32>
    %cst_37 = arith.constant 0.000000e+00 : f32
    %78 = vector.broadcast %cst_37 : f32 to vector<8x32xf32>
    %79 = arith.cmpf oge, %77, %78 : vector<8x32xf32>
    %cst_38 = arith.constant 2.000000e-01 : f32
    %80 = vector.broadcast %cst_38 : f32 to vector<8x32xf32>
    %81 = arith.mulf %80, %77 : vector<8x32xf32>
    %82 = arith.select %79, %77, %81 : vector<8x32xi1>, vector<8x32xf32>
    %c0_39 = arith.constant 0 : index
    %c0_40 = arith.constant 0 : index
    %83 = vector.load %arg11[%c0_39, %c0_40] : memref<8x32xf32, #tpu.memory_space<vmem>>, vector<8x32xf32>
    tpu.vector_store %arg11[%c0_39, %c0_40], %82 {strides = array<i32>} : memref<8x32xf32, #tpu.memory_space<vmem>>, vector<8x32xf32>,
    return
  }
}

</mosaic_0001>

<llo_original>
// kernel: tpu_custom_call.1
$region0: #{tpu_custom_call.1}
  #allocation0 [shape = 'u32[]', space=smem, size = 0x4, offset = 0x4, fixed_abs, tag = 'smem constant byte address 0x4 - core index']
  #allocation1 [shape = 'u32[144,128]{1,0:T(1,128)}', space=vmem, size = 0x12000, scoped, tag = 'internal scratch']
  %s0 = inlined_call_operand.vmem [shape: f32[8,2], index: 0, kind: input, shape index: {}]
  %s1 = inlined_call_operand.vmem [shape: f32[2,8], index: 1, kind: input, shape index: {}]
  %s2 = inlined_call_operand.vmem [shape: f32[1,8], index: 2, kind: input, shape index: {}]
  %s3 = inlined_call_operand.hbm [shape: f32[8,32], index: 3, kind: input, shape index: {}]
  %s4 = inlined_call_operand.vmem [shape: f32[1,32], index: 4, kind: input, shape index: {}]
  %s5 = inlined_call_operand.hbm [shape: f32[1,32], index: 5, kind: input, shape index: {}]
  %s6 = inlined_call_operand.hbm [shape: f32[1,32], index: 6, kind: input, shape index: {}]
  %s7 = inlined_call_operand.vmem [shape: f32[32,32], index: 7, kind: input, shape index: {}]
  %s8 = inlined_call_operand.vmem [shape: f32[1,32], index: 8, kind: input, shape index: {}]
  %s9 = inlined_call_operand.vmem [shape: f32[1,32], index: 9, kind: input, shape index: {}]
  %s10 = inlined_call_operand.vmem [shape: f32[1,32], index: 10, kind: input, shape index: {}]
  %s11 = inlined_call_operand.hbm [shape: f32[8,32], index: 11, kind: output, shape index: {}]
  %s12 = sld [smem:[#allocation0]]
  $region66: #{tpu_custom_call.1} parent=0
    _
  %s14 = ssub.s32 1, %s12
  %s15 = scalar_select 0, %s14, %s12
  $region1: #{tpu_custom_call.1} parent=0
    #allocation2 [shape = 'u8[4096]{0}', space=vmem, size = 0x1000, scoped, tag = 'input window, operand 3, single buffered']
    #allocation3 [shape = 's32[1]{0}', space=sflag, size = 0x4, scoped, tag = 'scoped memory for tpu_custom_call.1']
    #allocation4 [shape = 's32[1]{0}', space=sflag, size = 0x4, scoped, tag = 'scoped memory for tpu_custom_call.1']
    #allocation5 [shape = 'u8[512]{0}', space=vmem, size = 0x400, scoped, tag = 'input window, operand 5, single buffered']
    #allocation6 [shape = 's32[1]{0}', space=sflag, size = 0x4, scoped, tag = 'scoped memory for tpu_custom_call.1']
    #allocation7 [shape = 'u8[512]{0}', space=vmem, size = 0x400, scoped, tag = 'input window, operand 6, single buffered']
    #allocation8 [shape = 'u8[4096]{0}', space=vmem, size = 0x1000, scoped, tag = 'output window, operand 0, single buffered']
    %16 = vsyncpa [#allocation3], 0
    %17 = vsyncpa [#allocation6], 0
    %18 = vsyncpa [#allocation4], 0
    // Predicated region
    $region2: #{tpu_custom_call.1} parent=1 // pred_check
      _
    $region3: #{tpu_custom_call.1} parent=1 // pred_check_branch
      %20 = sbr.rel (0) target = $region5
    $region4: #{tpu_custom_call.1} parent=1 // pred_region
      _
    $region5: #{tpu_custom_call.1} parent=1 // pred_fallthru
      _
    // Predicated region
    $region6: #{tpu_custom_call.1} parent=1 // pred_check
      _
    $region7: #{tpu_custom_call.1} parent=1 // pred_check_branch
      %22 = sbr.rel (0) target = $region9
    $region8: #{tpu_custom_call.1} parent=1 // pred_region
      _
    $region9: #{tpu_custom_call.1} parent=1 // pred_fallthru
      _
    // Predicated region
    $region10: #{tpu_custom_call.1} parent=1 // pred_check
      _
    $region11: #{tpu_custom_call.1} parent=1 // pred_check_branch
      %24 = sbr.rel (0) target = $region13
    $region12: #{tpu_custom_call.1} parent=1 // pred_region
      _
    $region13: #{tpu_custom_call.1} parent=1 // pred_fallthru
      _
    // Predicated region
    $region14: #{tpu_custom_call.1} parent=1 // pred_check
      _
    $region15: #{tpu_custom_call.1} parent=1 // pred_check_branch
      %26 = sbr.rel (0) target = $region17
    $region16: #{tpu_custom_call.1} parent=1 // pred_region
      %s28 = ssub.s32 128, 128
      %29 = vsyncadd [#allocation3], %s28
      %s31 = sshll.u32 [#allocation2], 4
      %s32 = int_to_ptr.vmem [resolvable:$true] %s31
      %34 = dma.hbm_to_vmem [thread:$0]  %s3, 128, %s32, [#allocation3]
    $region17: #{tpu_custom_call.1} parent=1 // pred_fallthru
      _
    // Predicated region
    $region18: #{tpu_custom_call.1} parent=1 // pred_check
      _
    $region19: #{tpu_custom_call.1} parent=1 // pred_check_branch
      %36 = sbr.rel (0) target = $region21
    $region20: #{tpu_custom_call.1} parent=1 // pred_region
      _
    $region21: #{tpu_custom_call.1} parent=1 // pred_fallthru
      _
    // Predicated region
    $region22: #{tpu_custom_call.1} parent=1 // pred_check
      _
    $region23: #{tpu_custom_call.1} parent=1 // pred_check_branch
      %38 = sbr.rel (0) target = $region25
    $region24: #{tpu_custom_call.1} parent=1 // pred_region
      %s40 = ssub.s32 16, 16
      %41 = vsyncadd [#allocation6], %s40
      %s43 = sshll.u32 [#allocation5], 4
      %s44 = int_to_ptr.vmem [resolvable:$true] %s43
      %46 = dma.hbm_to_vmem [thread:$0]  %s5, 16, %s44, [#allocation6]
    $region25: #{tpu_custom_call.1} parent=1 // pred_fallthru
      _
    // Predicated region
    $region26: #{tpu_custom_call.1} parent=1 // pred_check
      _
    $region27: #{tpu_custom_call.1} parent=1 // pred_check_branch
      %48 = sbr.rel (0) target = $region29
    $region28: #{tpu_custom_call.1} parent=1 // pred_region
      %s50 = ssub.s32 16, 16
      %51 = vsyncadd [#allocation6], %s50
      %s53 = sshll.u32 [#allocation7], 4
      %s54 = int_to_ptr.vmem [resolvable:$true] %s53
      %56 = dma.hbm_to_vmem [thread:$0]  %s6, 16, %s54, [#allocation6]
    $region29: #{tpu_custom_call.1} parent=1 // pred_fallthru
      _
    // Predicated region
    $region30: #{tpu_custom_call.1} parent=1 // pred_check
      _
    $region31: #{tpu_custom_call.1} parent=1 // pred_check_branch
      %58 = sbr.rel (0) target = $region33
    $region32: #{tpu_custom_call.1} parent=1 // pred_region
      _
    $region33: #{tpu_custom_call.1} parent=1 // pred_fallthru
      _
    // Predicated region
    $region34: #{tpu_custom_call.1} parent=1 // pred_check
      _
    $region35: #{tpu_custom_call.1} parent=1 // pred_check_branch
      %60 = sbr.rel (0) target = $region37
    $region36: #{tpu_custom_call.1} parent=1 // pred_region
      _
    $region37: #{tpu_custom_call.1} parent=1 // pred_fallthru
      _
    // Predicated region
    $region38: #{tpu_custom_call.1} parent=1 // pred_check
      _
    $region39: #{tpu_custom_call.1} parent=1 // pred_check_branch
      %62 = sbr.rel (0) target = $region41
    $region40: #{tpu_custom_call.1} parent=1 // pred_region
      _
    $region41: #{tpu_custom_call.1} parent=1 // pred_fallthru
      _
    // Predicated region
    $region42: #{tpu_custom_call.1} parent=1 // pred_check
      _
    $region43: #{tpu_custom_call.1} parent=1 // pred_check_branch
      %64 = sbr.rel (0) target = $region45
    $region44: #{tpu_custom_call.1} parent=1 // pred_region
      _
    $region45: #{tpu_custom_call.1} parent=1 // pred_fallthru
      _
    // Predicated region
    $region46: #{tpu_custom_call.1} parent=1 // pred_check
      _
    $region47: #{tpu_custom_call.1} parent=1 // pred_check_branch
      %66 = sbr.rel (0) target = $region49
    $region48: #{tpu_custom_call.1} parent=1 // pred_region
      %67 = dma.done [#allocation3], 128
    $region49: #{tpu_custom_call.1} parent=1 // pred_fallthru
      _
    // Predicated region
    $region50: #{tpu_custom_call.1} parent=1 // pred_check
      _
    $region51: #{tpu_custom_call.1} parent=1 // pred_check_branch
      %69 = sbr.rel (0) target = $region53
    $region52: #{tpu_custom_call.1} parent=1 // pred_region
      %70 = dma.done [#allocation6], 16
    $region53: #{tpu_custom_call.1} parent=1 // pred_fallthru
      _
    // Predicated region
    $region54: #{tpu_custom_call.1} parent=1 // pred_check
      _
    $region55: #{tpu_custom_call.1} parent=1 // pred_check_branch
      %72 = sbr.rel (0) target = $region57
    $region56: #{tpu_custom_call.1} parent=1 // pred_region
      %73 = dma.done [#allocation6], 16
    $region57: #{tpu_custom_call.1} parent=1 // pred_fallthru
      _
    %v74 = vld [vmem:[%s0] sm:$0xff]
    %v75 = vld [vmem:[%s1] sm:$0x3]
    %v76 = vld [vmem:[%s2] sm:$0x1]
    %v78 = vlaneseq
    %v79 = vshrl.u32 %v78, 7
    %v80 = vsub.s32 0, %v79
    %v81 = vrot.slane %v76, %v80
    %vm83 = vcmask 15360
    %v85 = vsel %vm83, %v74, 0
    %vm87 = vcmask 1041408
    %v89 = vsel %vm87, %v75, 0
    %91 = vmatprep.subr.mxu0 0.0
    %92 = vmatpush1.msra.mxu0 %v89
    %93 = vmatprep.subr.mxu0 0.0
    %94 = vmatpush1.msra.mxu0 0.0
    %95 = vmatprep.subr.mxu0 0.0
    %96 = vmatpush1.msra.mxu0 0.0
    %97 = vmatprep.subr.mxu0 0.0
    %98 = vmatpush1.msra.mxu0 0.0
    %99 = vmatprep.subr.mxu0 0.0
    %100 = vmatpush1.msra.mxu0 0.0
    %101 = vmatprep.subr.mxu0 0.0
    %102 = vmatpush1.msra.mxu0 0.0
    %103 = vmatprep.subr.mxu0 0.0
    %104 = vmatpush1.msra.mxu0 0.0
    %105 = vmatprep.subr.mxu0 0.0
    %106 = vmatpush1.msra.mxu0 0.0
    %107 = vmatprep.subr.mxu0 0.0
    %108 = vmatpush1.msra.mxu0 0.0
    %109 = vmatprep.subr.mxu0 0.0
    %110 = vmatpush1.msra.mxu0 0.0
    %111 = vmatprep.subr.mxu0 0.0
    %112 = vmatpush1.msra.mxu0 0.0
    %113 = vmatprep.subr.mxu0 0.0
    %114 = vmatpush1.msra.mxu0 0.0
    %115 = vmatprep.subr.mxu0 0.0
    %116 = vmatpush1.msra.mxu0 0.0
    %117 = vmatprep.subr.mxu0 0.0
    %118 = vmatpush1.msra.mxu0 0.0
    %119 = vmatprep.subr.mxu0 0.0
    %120 = vmatpush1.msra.mxu0 0.0
    %121 = vmatprep.subr.mxu0 0.0
    %122 = vmatpush1.msra.mxu0 0.0
    %123 = vmatprep.subr.mxu0 0.0
    %124 = vmatpush1.msra.mxu0 0.0
    %125 = vmatprep.subr.mxu0 0.0
    %126 = vmatpush1.msra.mxu0 0.0
    %127 = vmatprep.subr.mxu0 0.0
    %128 = vmatpush1.msra.mxu0 0.0
    %129 = vmatprep.subr.mxu0 0.0
    %130 = vmatpush1.msra.mxu0 0.0
    %131 = vmatprep.subr.mxu0 0.0
    %132 = vmatpush1.msra.mxu0 0.0
    %133 = vmatprep.subr.mxu0 0.0
    %134 = vmatpush1.msra.mxu0 0.0
    %135 = vmatprep.subr.mxu0 0.0
    %136 = vmatpush1.msra.mxu0 0.0
    %137 = vmatprep.subr.mxu0 0.0
    %138 = vmatpush1.msra.mxu0 0.0
    %139 = vmatprep.subr.mxu0 0.0
    %140 = vmatpush1.msra.mxu0 0.0
    %141 = vmatprep.subr.mxu0 0.0
    %142 = vmatpush1.msra.mxu0 0.0
    %143 = vmatprep.subr.mxu0 0.0
    %144 = vmatpush1.msra.mxu0 0.0
    %145 = vmatprep.subr.mxu0 0.0
    %146 = vmatpush1.msra.mxu0 0.0
    %147 = vmatprep.subr.mxu0 0.0
    %148 = vmatpush1.msra.mxu0 0.0
    %149 = vmatprep.subr.mxu0 0.0
    %150 = vmatpush1.msra.mxu0 0.0
    %151 = vmatprep.subr.mxu0 0.0
    %152 = vmatpush1.msra.mxu0 0.0
    %153 = vmatprep.subr.mxu0 0.0
    %154 = vmatpush1.msra.mxu0 0.0
    %155 = vmatprep.mubr.f32.mxu0 0.0
    %156 = vmatmul.mubr.f32.gmra.mrb[0].mxu0 %v85
    %v157 = vpop.f32.mrb[0].mxu0
    %v158 = vadd.f32 %v81, %v157
    %v159 = vpop.f32.mrb[0].mxu0
    %160 = vdwg.mxu0
    %vm161 = vcmp.ge.f32.partialorder %v158, 0.0
    %v162 = vmul.f32 %v158, 0.2
    %v163 = vsel %vm161, %v158, %v162
    %v164 = vld [vmem:[#allocation2] sm:$0xff]
    %v165 = vld [vmem:[%s4] sm:$0x1]
    %v167 = vlaneseq
    %v168 = vshrl.u32 %v167, 7
    %v169 = vsub.s32 0, %v168
    %v170 = vrot.slane %v165, %v169
    %vm172 = vcmask 64512
    %v174 = vsel %vm172, %v163, 0
    %176 = vmatprep.subr.mxu0 0.0
    %177 = vmatpush1.msra.mxu0 %v164
    %178 = vmatprep.subr.mxu0 0.0
    %179 = vmatpush1.msra.mxu0 0.0
    %180 = vmatprep.subr.mxu0 0.0
    %181 = vmatpush1.msra.mxu0 0.0
    %182 = vmatprep.subr.mxu0 0.0
    %183 = vmatpush1.msra.mxu0 0.0
    %184 = vmatprep.subr.mxu0 0.0
    %185 = vmatpush1.msra.mxu0 0.0
    %186 = vmatprep.subr.mxu0 0.0
    %187 = vmatpush1.msra.mxu0 0.0
    %188 = vmatprep.subr.mxu0 0.0
    %189 = vmatpush1.msra.mxu0 0.0
    %190 = vmatprep.subr.mxu0 0.0
    %191 = vmatpush1.msra.mxu0 0.0
    %192 = vmatprep.subr.mxu0 0.0
    %193 = vmatpush1.msra.mxu0 0.0
    %194 = vmatprep.subr.mxu0 0.0
    %195 = vmatpush1.msra.mxu0 0.0
    %196 = vmatprep.subr.mxu0 0.0
    %197 = vmatpush1.msra.mxu0 0.0
    %198 = vmatprep.subr.mxu0 0.0
    %199 = vmatpush1.msra.mxu0 0.0
    %200 = vmatprep.subr.mxu0 0.0
    %201 = vmatpush1.msra.mxu0 0.0
    %202 = vmatprep.subr.mxu0 0.0
    %203 = vmatpush1.msra.mxu0 0.0
    %204 = vmatprep.subr.mxu0 0.0
    %205 = vmatpush1.msra.mxu0 0.0
    %206 = vmatprep.subr.mxu0 0.0
    %207 = vmatpush1.msra.mxu0 0.0
    %208 = vmatprep.subr.mxu0 0.0
    %209 = vmatpush1.msra.mxu0 0.0
    %210 = vmatprep.subr.mxu0 0.0
    %211 = vmatpush1.msra.mxu0 0.0
    %212 = vmatprep.subr.mxu0 0.0
    %213 = vmatpush1.msra.mxu0 0.0
    %214 = vmatprep.subr.mxu0 0.0
    %215 = vmatpush1.msra.mxu0 0.0
    %216 = vmatprep.subr.mxu0 0.0
    %217 = vmatpush1.msra.mxu0 0.0
    %218 = vmatprep.subr.mxu0 0.0
    %219 = vmatpush1.msra.mxu0 0.0
    %220 = vmatprep.subr.mxu0 0.0
    %221 = vmatpush1.msra.mxu0 0.0
    %222 = vmatprep.subr.mxu0 0.0
    %223 = vmatpush1.msra.mxu0 0.0
    %224 = vmatprep.subr.mxu0 0.0
    %225 = vmatpush1.msra.mxu0 0.0
    %226 = vmatprep.subr.mxu0 0.0
    %227 = vmatpush1.msra.mxu0 0.0
    %228 = vmatprep.subr.mxu0 0.0
    %229 = vmatpush1.msra.mxu0 0.0
    %230 = vmatprep.subr.mxu0 0.0
    %231 = vmatpush1.msra.mxu0 0.0
    %232 = vmatprep.subr.mxu0 0.0
    %233 = vmatpush1.msra.mxu0 0.0
    %234 = vmatprep.subr.mxu0 0.0
    %235 = vmatpush1.msra.mxu0 0.0
    %236 = vmatprep.subr.mxu0 0.0
    %237 = vmatpush1.msra.mxu0 0.0
    %238 = vmatprep.subr.mxu0 0.0
    %239 = vmatpush1.msra.mxu0 0.0
    %240 = vmatprep.mubr.f32.mxu0 0.0
    %241 = vmatmul.mubr.f32.gmra.mrb[0].mxu0 %v174
    %v242 = vpop.f32.mrb[0].mxu0
    %v243 = vadd.f32 %v170, %v242
    %v244 = vpop.f32.mrb[0].mxu0
    %245 = vdwg.mxu0
    %v246 = vld [vmem:[#allocation5] sm:$0x1]
    %v247 = vld [vmem:[#allocation7] sm:$0x1]
    %vm248 = vcmask 261120
    %v249 = vsel %vm248, %v243, 0.0
    %v250 = vrot.slane %v249, 4
    %v251 = vadd.f32 %v249, %v250
    %v252 = vrot.slane %v251, 2
    %v253 = vadd.f32 %v251, %v252
    %v254 = vrot.slane %v253, 1
    %v255 = vadd.f32 %v253, %v254
    %v256 = vrcp.pop 8.0
    %v257 = vmul.f32 %v255, %v256
    %v258 = vsub.f32 %v243, %v257
    %v259 = vmul.f32 %v258, %v258
    %v260 = vsel %vm248, %v259, 0.0
    %v261 = vrot.slane %v260, 4
    %v262 = vadd.f32 %v260, %v261
    %v263 = vrot.slane %v262, 2
    %v264 = vadd.f32 %v262, %v263
    %v265 = vrot.slane %v264, 1
    %v266 = vadd.f32 %v264, %v265
    %v267 = vmul.f32 %v266, %v256
    %v268 = vadd.f32 %v267, 1e-05
    %v269 = vrsqrt.pop %v268
    %v270 = vmul.f32 %v258, %v269
    %v272 = vlaneseq
    %v273 = vshrl.u32 %v272, 7
    %v274 = vsub.s32 0, %v273
    %v275 = vrot.slane %v246, %v274
    %v277 = vmul.f32 %v270, %v275
    %v279 = vlaneseq
    %v280 = vshrl.u32 %v279, 7
    %v281 = vsub.s32 0, %v280
    %v282 = vrot.slane %v247, %v281
    %v284 = vadd.f32 %v277, %v282
    %vm285 = vcmp.ge.f32.partialorder %v284, 0.0
    %v286 = vmul.f32 %v284, 0.2
    %v287 = vsel %vm285, %v284, %v286
    %v288 = vld [vmem:[%s7] sm:$0xff]
    %v289 = vld [vmem:[%s7 + $0x8] sm:$0xff]
    %v290 = vld [vmem:[%s7 + $0x10] sm:$0xff]
    %v291 = vld [vmem:[%s7 + $0x18] sm:$0xff]
    %v292 = vld [vmem:[%s8] sm:$0x1]
    %v294 = vlaneseq
    %v295 = vshrl.u32 %v294, 7
    %v296 = vsub.s32 0, %v295
    %v297 = vrot.slane %v292, %v296
    %v300 = vsel %vm248, %v287, 0
    %302 = vmatprep.subr.mxu0 0.0
    %303 = vmatpush1.msra.mxu0 %v288
    %304 = vmatprep.subr.mxu0 0.0
    %305 = vmatpush1.msra.mxu0 %v289
    %306 = vmatprep.subr.mxu0 0.0
    %307 = vmatpush1.msra.mxu0 %v290
    %308 = vmatprep.subr.mxu0 0.0
    %309 = vmatpush1.msra.mxu0 %v291
    %310 = vmatprep.subr.mxu0 0.0
    %311 = vmatpush1.msra.mxu0 0.0
    %312 = vmatprep.subr.mxu0 0.0
    %313 = vmatpush1.msra.mxu0 0.0
    %314 = vmatprep.subr.mxu0 0.0
    %315 = vmatpush1.msra.mxu0 0.0
    %316 = vmatprep.subr.mxu0 0.0
    %317 = vmatpush1.msra.mxu0 0.0
    %318 = vmatprep.subr.mxu0 0.0
    %319 = vmatpush1.msra.mxu0 0.0
    %320 = vmatprep.subr.mxu0 0.0
    %321 = vmatpush1.msra.mxu0 0.0
    %322 = vmatprep.subr.mxu0 0.0
    %323 = vmatpush1.msra.mxu0 0.0
    %324 = vmatprep.subr.mxu0 0.0
    %325 = vmatpush1.msra.mxu0 0.0
    %326 = vmatprep.subr.mxu0 0.0
    %327 = vmatpush1.msra.mxu0 0.0
    %328 = vmatprep.subr.mxu0 0.0
    %329 = vmatpush1.msra.mxu0 0.0
    %330 = vmatprep.subr.mxu0 0.0
    %331 = vmatpush1.msra.mxu0 0.0
    %332 = vmatprep.subr.mxu0 0.0
    %333 = vmatpush1.msra.mxu0 0.0
    %334 = vmatprep.subr.mxu0 0.0
    %335 = vmatpush1.msra.mxu0 0.0
    %336 = vmatprep.subr.mxu0 0.0
    %337 = vmatpush1.msra.mxu0 0.0
    %338 = vmatprep.subr.mxu0 0.0
    %339 = vmatpush1.msra.mxu0 0.0
    %340 = vmatprep.subr.mxu0 0.0
    %341 = vmatpush1.msra.mxu0 0.0
    %342 = vmatprep.subr.mxu0 0.0
    %343 = vmatpush1.msra.mxu0 0.0
    %344 = vmatprep.subr.mxu0 0.0
    %345 = vmatpush1.msra.mxu0 0.0
    %346 = vmatprep.subr.mxu0 0.0
    %347 = vmatpush1.msra.mxu0 0.0
    %348 = vmatprep.subr.mxu0 0.0
    %349 = vmatpush1.msra.mxu0 0.0
    %350 = vmatprep.subr.mxu0 0.0
    %351 = vmatpush1.msra.mxu0 0.0
    %352 = vmatprep.subr.mxu0 0.0
    %353 = vmatpush1.msra.mxu0 0.0
    %354 = vmatprep.subr.mxu0 0.0
    %355 = vmatpush1.msra.mxu0 0.0
    %356 = vmatprep.subr.mxu0 0.0
    %357 = vmatpush1.msra.mxu0 0.0
    %358 = vmatprep.subr.mxu0 0.0
    %359 = vmatpush1.msra.mxu0 0.0
    %360 = vmatprep.subr.mxu0 0.0
    %361 = vmatpush1.msra.mxu0 0.0
    %362 = vmatprep.subr.mxu0 0.0
    %363 = vmatpush1.msra.mxu0 0.0
    %364 = vmatprep.subr.mxu0 0.0
    %365 = vmatpush1.msra.mxu0 0.0
    %366 = vmatprep.mubr.f32.mxu0 0.0
    %367 = vmatmul.mubr.f32.gmra.mrb[0].mxu0 %v300
    %v368 = vpop.f32.mrb[0].mxu0
    %v369 = vadd.f32 %v297, %v368
    %v370 = vpop.f32.mrb[0].mxu0
    %371 = vdwg.mxu0
    %v372 = vld [vmem:[%s9] sm:$0x1]
    %v373 = vld [vmem:[%s10] sm:$0x1]
    %v374 = vsel %vm248, %v369, 0.0
    %v375 = vrot.slane %v374, 4
    %v376 = vadd.f32 %v374, %v375
    %v377 = vrot.slane %v376, 2
    %v378 = vadd.f32 %v376, %v377
    %v379 = vrot.slane %v378, 1
    %v380 = vadd.f32 %v378, %v379
    %v381 = vmul.f32 %v380, %v256
    %v382 = vsub.f32 %v369, %v381
    %v383 = vmul.f32 %v382, %v382
    %v384 = vsel %vm248, %v383, 0.0
    %v385 = vrot.slane %v384, 4
    %v386 = vadd.f32 %v384, %v385
    %v387 = vrot.slane %v386, 2
    %v388 = vadd.f32 %v386, %v387
    %v389 = vrot.slane %v388, 1
    %v390 = vadd.f32 %v388, %v389
    %v391 = vmul.f32 %v390, %v256
    %v392 = vadd.f32 %v391, 1e-05
    %v393 = vrsqrt.pop %v392
    %v394 = vmul.f32 %v382, %v393
    %v396 = vlaneseq
    %v397 = vshrl.u32 %v396, 7
    %v398 = vsub.s32 0, %v397
    %v399 = vrot.slane %v372, %v398
    %v401 = vmul.f32 %v394, %v399
    %v403 = vlaneseq
    %v404 = vshrl.u32 %v403, 7
    %v405 = vsub.s32 0, %v404
    %v406 = vrot.slane %v373, %v405
    %v408 = vadd.f32 %v401, %v406
    %vm409 = vcmp.ge.f32.partialorder %v408, 0.0
    %v410 = vmul.f32 %v408, 0.2
    %v411 = vsel %vm409, %v408, %v410
    %412 = vst.msk [vmem:[#allocation8] sm:$0xff] %vm248, %v411
    // Predicated region
    $region58: #{tpu_custom_call.1} parent=1 // pred_check
      _
    $region59: #{tpu_custom_call.1} parent=1 // pred_check_branch
      %414 = sbr.rel (0) target = $region61
    $region60: #{tpu_custom_call.1} parent=1 // pred_region
      %s416 = ssub.s32 128, 128
      %417 = vsyncadd [#allocation4], %s416
      %s419 = sshll.u32 [#allocation8], 4
      %s420 = int_to_ptr.vmem [resolvable:$true] %s419
      %422 = dma.vmem_to_hbm [thread:$0]  %s420, 128, %s11, [#allocation4]
    $region61: #{tpu_custom_call.1} parent=1 // pred_fallthru
      _
    // Predicated region
    $region62: #{tpu_custom_call.1} parent=1 // pred_check
      _
    $region63: #{tpu_custom_call.1} parent=1 // pred_check_branch
      %424 = sbr.rel (0) target = $region65
    $region64: #{tpu_custom_call.1} parent=1 // pred_region
      %425 = dma.done [#allocation4], 128
    $region65: #{tpu_custom_call.1} parent=1 // pred_fallthru
      _
    %426 = vsyncpa [#allocation3], 1
    %427 = vsyncpa [#allocation6], 1
    %428 = vsyncpa [#allocation4], 1

</llo_original>
